<compile_context>
chip_gen: v5e
topology: v5e:2x2
jax: 0.10.0
libtpu: 0.0.40
codegen_flags: <defaults>
</compile_context>

<pallas_src>
import jax
import jax.numpy as jnp
from jax.experimental import pallas as pl
from jax.experimental.pallas import tpu as pltpu

HIDDEN_LAYER_SIZE = 256
MAX_TILE_N = 1024   # per-step batch tile (rows)
MIN_TILE_N = 16     # bf16 sublane quantum (keeps packed stores unmasked)


def _round_up(x, m):
    return ((x + m - 1) // m) * m


def _choose_tile_n(n):
    # Aim for >= 2 grid steps when the batch allows it (v7x megacore sharding
    # via dimension_semantics="parallel"), while keeping tiles large enough to
    # amortize per-step grid overhead. Multiple of 16 for bf16 sublane packing.
    t = _round_up(max(pl.cdiv(n, 2), 1), MIN_TILE_N)
    return max(MIN_TILE_N, min(MAX_TILE_N, t))


def _mlp_kernel(x_ref, w1_ref, b1_ref, w2_ref, b2_ref, w3_ref, b3_ref, o_ref):
    # x arrives in f32 and is cast to bf16 here (cheaper than a wrapper pass);
    # MXU accumulates in f32; bias + ReLU in f32; hidden activations are
    # written straight to bf16 so they feed the next matmul without f32
    # VMEM temporaries.
    x = x_ref[...].astype(jnp.bfloat16)

    h1 = jnp.maximum(
        jnp.dot(x, w1_ref[...], preferred_element_type=jnp.float32) + b1_ref[...],
        0.0).astype(jnp.bfloat16)

    h2 = jnp.maximum(
        jnp.dot(h1, w2_ref[...], preferred_element_type=jnp.float32) + b2_ref[...],
        0.0).astype(jnp.bfloat16)

    out = jnp.dot(h2, w3_ref[...], preferred_element_type=jnp.float32) + b3_ref[...]
    o_ref[...] = out.astype(o_ref.dtype)  # bf16, lane-dense store


def base_nn_forward(x, params):
    """Fused BaseNN MLP forward pass as a single batched Pallas kernel.

    x: (N, D) float32
    params: dict with w1 (D,H), b1 (1,H), w2 (H,H), b2 (1,H), w3 (H,O), b3 (1,O)
    Returns (N, O) float32.
    """
    w1, b1 = params["w1"], params["b1"]
    w2, b2 = params["w2"], params["b2"]
    w3, b3 = params["w3"], params["b3"]

    n, d = x.shape
    h = w1.shape[1]
    o = w3.shape[1]

    # --- lane-dense output: pad O up to a multiple of 128 (zero columns) ----
    o_pad = _round_up(o, 128)
    if o_pad != o:
        w3 = jnp.pad(w3, ((0, 0), (0, o_pad - o)))
        b3 = jnp.pad(b3, ((0, 0), (0, o_pad - o)))

    # --- bf16 MXU weight operands (small, one-time), f32 biases -------------
    w1_bf = w1.astype(jnp.bfloat16)
    w2_bf = w2.astype(jnp.bfloat16)
    w3_bf = w3.astype(jnp.bfloat16)
    b1_f = b1.astype(jnp.float32)
    b2_f = b2.astype(jnp.float32)
    b3_f = b3.astype(jnp.float32)

    # --- batch tiling: no padding, partial last tile -------------------------
    tile_n = _choose_tile_n(n)
    grid = (pl.cdiv(n, tile_n),)

    resident = lambda shape: pl.BlockSpec(shape, lambda i: (0, 0))

    out_bf16 = pl.pallas_call(
        _mlp_kernel,
        out_shape=jax.ShapeDtypeStruct((n, o_pad), jnp.bfloat16),
        grid=grid,
        in_specs=[
            pl.BlockSpec((tile_n, d), lambda i: (i, 0)),  # x tile (pipelined, f32)
            resident((d, h)),                              # w1 (VMEM-resident)
            resident((1, h)),                              # b1
            resident((h, h)),                              # w2
            resident((1, h)),                              # b2
            resident((h, o_pad)),                          # w3
            resident((1, o_pad)),                          # b3
        ],
        out_specs=pl.BlockSpec((tile_n, o_pad), lambda i: (i, 0)),
        compiler_params=pltpu.CompilerParams(
            dimension_semantics=("parallel",)),
    )(x, w1_bf, b1_f, w2_bf, b2_f, w3_bf, b3_f)

    # Drop padded O columns and upcast (slice + convert fuse in XLA).
    return out_bf16[:, :o].astype(jnp.float32)


def init_params(key, input_size, output_size, hidden_size=HIDDEN_LAYER_SIZE):
    """Deterministic init mimicking nn.Linear's U(-1/sqrt(fan_in), 1/sqrt(fan_in))."""
    ks = jax.random.split(key, 6)

    def linear(kw, kb, fan_in, fan_out):
        bound = 1.0 / jnp.sqrt(jnp.float32(fan_in))
        w = jax.random.uniform(kw, (fan_in, fan_out), jnp.float32, -bound, bound)
        b = jax.random.uniform(kb, (1, fan_out), jnp.float32, -bound, bound)
        return w, b

    w1, b1 = linear(ks[0], ks[1], input_size, hidden_size)
    w2, b2 = linear(ks[2], ks[3], hidden_size, hidden_size)
    w3, b3 = linear(ks[4], ks[5], hidden_size, output_size)
    return {"w1": w1, "b1": b1, "w2": w2, "b2": b2, "w3": w3, "b3": b3}


def reference_forward(x, p):
    """Pure-JAX reference matching the kernel's numerics
    (bf16 operands, f32 accumulation, bf16 final store)."""
    bf = jnp.bfloat16
    h1 = jnp.maximum(
        jnp.dot(x.astype(bf), p["w1"].astype(bf), preferred_element_type=jnp.float32)
        + p["b1"], 0.0)
    h2 = jnp.maximum(
        jnp.dot(h1.astype(bf), p["w2"].astype(bf), preferred_element_type=jnp.float32)
        + p["b2"], 0.0)
    out = (jnp.dot(h2.astype(bf), p["w3"].astype(bf), preferred_element_type=jnp.float32)
           + p["b3"])
    return out.astype(bf).astype(jnp.float32)


if __name__ == "__main__":
    key = jax.random.PRNGKey(0)
    k_param, k_x, k_x2, k_x3 = jax.random.split(key, 4)

    batch = 8
    input_size = 32
    output_size = 8

    params = init_params(k_param, input_size, output_size, HIDDEN_LAYER_SIZE)

    # Primary small test (single grid step, block covers whole batch).
    x = jax.random.normal(k_x, (batch, input_size), jnp.float32)
    out = base_nn_forward(x, params)
    jax.block_until_ready(out)
    ref = reference_forward(x, params)
    assert out.shape == (batch, output_size)
    assert jnp.allclose(out, ref, atol=2e-2, rtol=2e-2)

    # Ragged batch (partial tile, masked writeback).
    x2 = jax.random.normal(k_x2, (13, input_size), jnp.float32)
    out2 = base_nn_forward(x2, params)
    jax.block_until_ready(out2)
    ref2 = reference_forward(x2, params)
    assert out2.shape == (13, output_size)
    assert jnp.allclose(out2, ref2, atol=2e-2, rtol=2e-2)

    # Multi-step grid with a partial last tile (exercises megacore split path).
    x3 = jax.random.normal(k_x3, (100, input_size), jnp.float32)
    out3 = base_nn_forward(x3, params)
    jax.block_until_ready(out3)
    ref3 = reference_forward(x3, params)
    assert out3.shape == (100, output_size)
    assert jnp.allclose(out3, ref3, atol=2e-2, rtol=2e-2)

    print("KERNEL_OK")
</pallas_src>

<mosaic_0001>
module attributes {stable_mosaic.version = 11 : i64} {
  func.func @_mlp_kernel(%arg0: i32, %arg1: memref<16x32xf32, #tpu.memory_space<vmem>>, %arg2: memref<32x256xbf16, #tpu.memory_space<vmem>>, %arg3: memref<1x256xf32, #tpu.memory_space<vmem>>, %arg4: memref<256x256xbf16, #tpu.memory_space<vmem>>, %arg5: memref<1x256xf32, #tpu.memory_space<vmem>>, %arg6: memref<256x128xbf16, #tpu.memory_space<vmem>>, %arg7: memref<1x128xf32, #tpu.memory_space<vmem>>, %arg8: memref<16x128xbf16, #tpu.memory_space<vmem>>) attributes {dimension_semantics = [#tpu.dimension_semantics<parallel>], iteration_bounds = array<i64: 1>, scalar_prefetch = 0 : i64, scratch_operands = 0 : i64, tpu.core_type = #tpu.core_type<tc>, window_params = [{transform_indices = @transform_0, window_bounds = array<i64: 16, 32>}, {pipeline_mode = #tpu.pipeline_mode<synchronous>, transform_indices = @transform_1, window_bounds = array<i64: 32, 256>}, {pipeline_mode = #tpu.pipeline_mode<synchronous>, transform_indices = @transform_2, window_bounds = array<i64: 1, 256>}, {pipeline_mode = #tpu.pipeline_mode<synchronous>, transform_indices = @transform_3, window_bounds = array<i64: 256, 256>}, {pipeline_mode = #tpu.pipeline_mode<synchronous>, transform_indices = @transform_4, window_bounds = array<i64: 1, 256>}, {pipeline_mode = #tpu.pipeline_mode<synchronous>, transform_indices = @transform_5, window_bounds = array<i64: 256, 128>}, {pipeline_mode = #tpu.pipeline_mode<synchronous>, transform_indices = @transform_6, window_bounds = array<i64: 1, 128>}, {transform_indices = @transform_7, window_bounds = array<i64: 16, 128>}]} {
    %c0 = arith.constant 0 : index
    %c0_0 = arith.constant 0 : index
    %0 = vector.load %arg1[%c0, %c0_0] : memref<16x32xf32, #tpu.memory_space<vmem>>, vector<16x32xf32>
    %1 = arith.truncf %0 : vector<16x32xf32> to vector<16x32xbf16>
    %c0_1 = arith.constant 0 : index
    %c0_2 = arith.constant 0 : index
    %2 = vector.load %arg2[%c0_1, %c0_2] : memref<32x256xbf16, #tpu.memory_space<vmem>>, vector<32x256xbf16>
    %cst = arith.constant dense<0.000000e+00> : vector<16x256xf32>
    %3 = tpu.matmul %1, %2, %cst {dimension_numbers = #tpu.dot_dimension_numbers<[1], [0], [0], [1], [0, 0, 1, 1], [], []>} : vector<16x32xbf16>, vector<32x256xbf16>, vector<16x256xf32> -> vector<16x256xf32>
    %c0_3 = arith.constant 0 : index
    %c0_4 = arith.constant 0 : index
    %4 = vector.load %arg3[%c0_3, %c0_4] : memref<1x256xf32, #tpu.memory_space<vmem>>, vector<1x256xf32>
    %5 = vector.broadcast %4 : vector<1x256xf32> to vector<16x256xf32>
    %6 = arith.addf %3, %5 : vector<16x256xf32>
    %cst_5 = arith.constant 0.000000e+00 : f32
    %7 = vector.broadcast %cst_5 : f32 to vector<16x256xf32>
    %8 = arith.maximumf %6, %7 : vector<16x256xf32>
    %9 = arith.truncf %8 : vector<16x256xf32> to vector<16x256xbf16>
    %c0_6 = arith.constant 0 : index
    %c0_7 = arith.constant 0 : index
    %10 = vector.load %arg4[%c0_6, %c0_7] : memref<256x256xbf16, #tpu.memory_space<vmem>>, vector<256x256xbf16>
    %cst_8 = arith.constant dense<0.000000e+00> : vector<16x256xf32>
    %11 = tpu.matmul %9, %10, %cst_8 {dimension_numbers = #tpu.dot_dimension_numbers<[1], [0], [0], [1], [0, 0, 1, 1], [], []>} : vector<16x256xbf16>, vector<256x256xbf16>, vector<16x256xf32> -> vector<16x256xf32>
    %c0_9 = arith.constant 0 : index
    %c0_10 = arith.constant 0 : index
    %12 = vector.load %arg5[%c0_9, %c0_10] : memref<1x256xf32, #tpu.memory_space<vmem>>, vector<1x256xf32>
    %13 = vector.broadcast %12 : vector<1x256xf32> to vector<16x256xf32>
    %14 = arith.addf %11, %13 : vector<16x256xf32>
    %cst_11 = arith.constant 0.000000e+00 : f32
    %15 = vector.broadcast %cst_11 : f32 to vector<16x256xf32>
    %16 = arith.maximumf %14, %15 : vector<16x256xf32>
    %17 = arith.truncf %16 : vector<16x256xf32> to vector<16x256xbf16>
    %c0_12 = arith.constant 0 : index
    %c0_13 = arith.constant 0 : index
    %18 = vector.load %arg6[%c0_12, %c0_13] : memref<256x128xbf16, #tpu.memory_space<vmem>>, vector<256x128xbf16>
    %cst_14 = arith.constant dense<0.000000e+00> : vector<16x128xf32>
    %19 = tpu.matmul %17, %18, %cst_14 {dimension_numbers = #tpu.dot_dimension_numbers<[1], [0], [0], [1], [0, 0, 1, 1], [], []>} : vector<16x256xbf16>, vector<256x128xbf16>, vector<16x128xf32> -> vector<16x128xf32>
    %c0_15 = arith.constant 0 : index
    %c0_16 = arith.constant 0 : index
    %20 = vector.load %arg7[%c0_15, %c0_16] : memref<1x128xf32, #tpu.memory_space<vmem>>, vector<1x128xf32>
    %21 = vector.broadcast %20 : vector<1x128xf32> to vector<16x128xf32>
    %22 = arith.addf %19, %21 : vector<16x128xf32>
    %23 = arith.truncf %22 : vector<16x128xf32> to vector<16x128xbf16>
    %c0_17 = arith.constant 0 : index
    %c0_18 = arith.constant 0 : index
    %24 = vector.load %arg8[%c0_17, %c0_18] : memref<16x128xbf16, #tpu.memory_space<vmem>>, vector<16x128xbf16>
    tpu.vector_store %arg8[%c0_17, %c0_18], %23 {strides = array<i32>} : memref<16x128xbf16, #tpu.memory_space<vmem>>, vector<16x128xbf16>,
    return
  }
  func.func @transform_0(%arg0: i32) -> (i32, i32) {
    %c0_i32 = arith.constant 0 : i32
    %c0_i32_0 = arith.constant 0 : i32
    return %arg0, %c0_i32 : i32, i32
  }
  func.func @transform_1(%arg0: i32) -> (i32, i32) {
    %c0_i32 = arith.constant 0 : i32
    %c0_i32_0 = arith.constant 0 : i32
    %c0_i32_1 = arith.constant 0 : i32
    return %c0_i32, %c0_i32_0 : i32, i32
  }
  func.func @transform_2(%arg0: i32) -> (i32, i32) {
    %c0_i32 = arith.constant 0 : i32
    %c0_i32_0 = arith.constant 0 : i32
    %c0_i32_1 = arith.constant 0 : i32
    return %c0_i32, %c0_i32_0 : i32, i32
  }
  func.func @transform_3(%arg0: i32) -> (i32, i32) {
    %c0_i32 = arith.constant 0 : i32
    %c0_i32_0 = arith.constant 0 : i32
    %c0_i32_1 = arith.constant 0 : i32
    return %c0_i32, %c0_i32_0 : i32, i32
  }
  func.func @transform_4(%arg0: i32) -> (i32, i32) {
    %c0_i32 = arith.constant 0 : i32
    %c0_i32_0 = arith.constant 0 : i32
    %c0_i32_1 = arith.constant 0 : i32
    return %c0_i32, %c0_i32_0 : i32, i32
  }
  func.func @transform_5(%arg0: i32) -> (i32, i32) {
    %c0_i32 = arith.constant 0 : i32
    %c0_i32_0 = arith.constant 0 : i32
    %c0_i32_1 = arith.constant 0 : i32
    return %c0_i32, %c0_i32_0 : i32, i32
  }
  func.func @transform_6(%arg0: i32) -> (i32, i32) {
    %c0_i32 = arith.constant 0 : i32
    %c0_i32_0 = arith.constant 0 : i32
    %c0_i32_1 = arith.constant 0 : i32
    return %c0_i32, %c0_i32_0 : i32, i32
  }
  func.func @transform_7(%arg0: i32) -> (i32, i32) {
    %c0_i32 = arith.constant 0 : i32
    %c0_i32_0 = arith.constant 0 : i32
    return %arg0, %c0_i32 : i32, i32
  }
}

</mosaic_0001>

<llo_original>
// kernel: tpu_custom_call.1
$region0: #{tpu_custom_call.1}
  #allocation0 [shape = 'u32[]', space=smem, size = 0x4, offset = 0x4, fixed_abs, tag = 'smem constant byte address 0x4 - core index']
  #allocation1 [shape = 'u32[72,128]{1,0:T(1,128)}', space=vmem, size = 0x9000, scoped, tag = 'internal scratch']
  %s0 = inlined_call_operand.hbm [shape: f32[8,32], index: 0, kind: input, shape index: {}]
  %s1 = inlined_call_operand.hbm [shape: bf16[32,256], index: 1, kind: input, shape index: {}]
  %s2 = inlined_call_operand.hbm [shape: f32[1,256], index: 2, kind: input, shape index: {}]
  %s3 = inlined_call_operand.hbm [shape: bf16[256,256], index: 3, kind: input, shape index: {}]
  %s4 = inlined_call_operand.vmem [shape: f32[1,256], index: 4, kind: input, shape index: {}]
  %s5 = inlined_call_operand.hbm [shape: bf16[256,128], index: 5, kind: input, shape index: {}]
  %s6 = inlined_call_operand.vmem [shape: f32[1,128], index: 6, kind: input, shape index: {}]
  %s7 = inlined_call_operand.hbm [shape: bf16[8,128], index: 7, kind: output, shape index: {}]
  %s8 = sld [smem:[#allocation0]]
  $region58: #{tpu_custom_call.1} parent=0
    _
  %s10 = ssub.s32 1, %s8
  %s11 = scalar_select 0, %s10, %s8
  $region1: #{tpu_custom_call.1} parent=0
    #allocation2 [shape = 'u8[8192]{0}', space=vmem, size = 0x2000, scoped, tag = 'input window, operand 0, single buffered']
    #allocation3 [shape = 's32[1]{0}', space=sflag, size = 0x4, scoped, tag = 'scoped memory for tpu_custom_call.1']
    #allocation4 [shape = 's32[1]{0}', space=sflag, size = 0x4, scoped, tag = 'scoped memory for tpu_custom_call.1']
    #allocation5 [shape = 'u8[16384]{0}', space=vmem, size = 0x4000, scoped, tag = 'input window, operand 1, single buffered']
    #allocation6 [shape = 's32[1]{0}', space=sflag, size = 0x4, scoped, tag = 'scoped memory for tpu_custom_call.1']
    #allocation7 [shape = 'u8[1024]{0}', space=vmem, size = 0x400, scoped, tag = 'input window, operand 2, single buffered']
    #allocation8 [shape = 'u8[131072]{0}', space=vmem, size = 0x20000, scoped, tag = 'input window, operand 3, single buffered']
    #allocation9 [shape = 's32[1]{0}', space=sflag, size = 0x4, scoped, tag = 'scoped memory for tpu_custom_call.1']
    #allocation10 [shape = 'u8[65536]{0}', space=vmem, size = 0x10000, scoped, tag = 'input window, operand 5, single buffered']
    #allocation11 [shape = 'u8[4096]{0}', space=vmem, size = 0x1000, scoped, tag = 'output window, operand 0, single buffered']
    %12 = vsyncpa [#allocation3], 0
    %13 = vsyncpa [#allocation6], 0
    %14 = vsyncpa [#allocation9], 0
    %15 = vsyncpa [#allocation4], 0
    // Predicated region
    $region2: #{tpu_custom_call.1} parent=1 // pred_check
      _
    $region3: #{tpu_custom_call.1} parent=1 // pred_check_branch
      %17 = sbr.rel (0) target = $region5
    $region4: #{tpu_custom_call.1} parent=1 // pred_region
      %19 = vsyncadd [#allocation3], 128
      %s20 = sshll.u32 %s0, 4
      %s21 = int_to_ptr.hbm [resolvable:$true] %s20
      %s22 = sshll.u32 [#allocation2], 4
      %s23 = int_to_ptr.vmem [resolvable:$true] %s22
      %28 = dma.hbm_to_vmem [thread:$0]  %s21, 128, %s23, [#allocation3], 128, 128, 8
    $region5: #{tpu_custom_call.1} parent=1 // pred_fallthru
      _
    // Predicated region
    $region6: #{tpu_custom_call.1} parent=1 // pred_check
      _
    $region7: #{tpu_custom_call.1} parent=1 // pred_check_branch
      %30 = sbr.rel (0) target = $region9
    $region8: #{tpu_custom_call.1} parent=1 // pred_region
      %32 = vsyncadd [#allocation6], 0
      %s33 = sshll.u32 %s1, 4
      %s34 = int_to_ptr.hbm [resolvable:$true] %s33
      %s35 = sshll.u32 [#allocation5], 4
      %s36 = int_to_ptr.vmem [resolvable:$true] %s35
      %41 = dma.hbm_to_vmem [thread:$0]  %s34, 512, %s36, [#allocation6], 128, 128, 8
    $region9: #{tpu_custom_call.1} parent=1 // pred_fallthru
      _
    // Predicated region
    $region10: #{tpu_custom_call.1} parent=1 // pred_check
      _
    $region11: #{tpu_custom_call.1} parent=1 // pred_check_branch
      %43 = sbr.rel (0) target = $region13
    $region12: #{tpu_custom_call.1} parent=1 // pred_region
      %45 = vsyncadd [#allocation6], 0
      %s47 = sshll.u32 %s2, 4
      %s48 = int_to_ptr.hbm [resolvable:$true] %s47
      %s49 = sshll.u32 [#allocation7], 4
      %s50 = int_to_ptr.vmem [resolvable:$true] %s49
      %52 = dma.hbm_to_vmem [thread:$0]  %s48, 32, %s50, [#allocation6]
    $region13: #{tpu_custom_call.1} parent=1 // pred_fallthru
      _
    // Predicated region
    $region14: #{tpu_custom_call.1} parent=1 // pred_check
      _
    $region15: #{tpu_custom_call.1} parent=1 // pred_check_branch
      %54 = sbr.rel (0) target = $region17
    $region16: #{tpu_custom_call.1} parent=1 // pred_region
      %56 = vsyncadd [#allocation9], 0
      %s57 = sshll.u32 %s3, 4
      %s58 = int_to_ptr.hbm [resolvable:$true] %s57
      %s59 = sshll.u32 [#allocation8], 4
      %s60 = int_to_ptr.vmem [resolvable:$true] %s59
      %65 = dma.hbm_to_vmem [thread:$0]  %s58, 4096, %s60, [#allocation9], 128, 128, 8
    $region17: #{tpu_custom_call.1} parent=1 // pred_fallthru
      _
    // Predicated region
    $region18: #{tpu_custom_call.1} parent=1 // pred_check
      _
    $region19: #{tpu_custom_call.1} parent=1 // pred_check_branch
      %67 = sbr.rel (0) target = $region21
    $region20: #{tpu_custom_call.1} parent=1 // pred_region
      _
    $region21: #{tpu_custom_call.1} parent=1 // pred_fallthru
      _
    // Predicated region
    $region22: #{tpu_custom_call.1} parent=1 // pred_check
      _
    $region23: #{tpu_custom_call.1} parent=1 // pred_check_branch
      %69 = sbr.rel (0) target = $region25
    $region24: #{tpu_custom_call.1} parent=1 // pred_region
      %71 = vsyncadd [#allocation9], 0
      %s72 = sshll.u32 %s5, 4
      %s73 = int_to_ptr.hbm [resolvable:$true] %s72
      %s74 = sshll.u32 [#allocation10], 4
      %s75 = int_to_ptr.vmem [resolvable:$true] %s74
      %80 = dma.hbm_to_vmem [thread:$0]  %s73, 2048, %s75, [#allocation9], 64, 64, 4
    $region25: #{tpu_custom_call.1} parent=1 // pred_fallthru
      _
    // Predicated region
    $region26: #{tpu_custom_call.1} parent=1 // pred_check
      _
    $region27: #{tpu_custom_call.1} parent=1 // pred_check_branch
      %82 = sbr.rel (0) target = $region29
    $region28: #{tpu_custom_call.1} parent=1 // pred_region
      _
    $region29: #{tpu_custom_call.1} parent=1 // pred_fallthru
      _
    // Predicated region
    $region30: #{tpu_custom_call.1} parent=1 // pred_check
      _
    $region31: #{tpu_custom_call.1} parent=1 // pred_check_branch
      %84 = sbr.rel (0) target = $region33
    $region32: #{tpu_custom_call.1} parent=1 // pred_region
      %86 = dma.done [#allocation3], 256
    $region33: #{tpu_custom_call.1} parent=1 // pred_fallthru
      _
    // Predicated region
    $region34: #{tpu_custom_call.1} parent=1 // pred_check
      _
    $region35: #{tpu_custom_call.1} parent=1 // pred_check_branch
      %88 = sbr.rel (0) target = $region37
    $region36: #{tpu_custom_call.1} parent=1 // pred_region
      %90 = dma.done [#allocation6], 512
    $region37: #{tpu_custom_call.1} parent=1 // pred_fallthru
      _
    // Predicated region
    $region38: #{tpu_custom_call.1} parent=1 // pred_check
      _
    $region39: #{tpu_custom_call.1} parent=1 // pred_check_branch
      %92 = sbr.rel (0) target = $region41
    $region40: #{tpu_custom_call.1} parent=1 // pred_region
      %94 = dma.done [#allocation6], 32
    $region41: #{tpu_custom_call.1} parent=1 // pred_fallthru
      _
    // Predicated region
    $region42: #{tpu_custom_call.1} parent=1 // pred_check
      _
    $region43: #{tpu_custom_call.1} parent=1 // pred_check_branch
      %96 = sbr.rel (0) target = $region45
    $region44: #{tpu_custom_call.1} parent=1 // pred_region
      %98 = dma.done [#allocation9], 4096
    $region45: #{tpu_custom_call.1} parent=1 // pred_fallthru
      _
    // Predicated region
    $region46: #{tpu_custom_call.1} parent=1 // pred_check
      _
    $region47: #{tpu_custom_call.1} parent=1 // pred_check_branch
      %100 = sbr.rel (0) target = $region49
    $region48: #{tpu_custom_call.1} parent=1 // pred_region
      %102 = dma.done [#allocation9], 2048
    $region49: #{tpu_custom_call.1} parent=1 // pred_fallthru
      _
    %v104 = vld [vmem:[#allocation2] sm:$0xff]
    %v105 = vld [vmem:[#allocation2 + $0x8] sm:$0xff]
    %v106 = vpack.c.bf16 %v105, %v104
    %v107 = vld [vmem:[#allocation5] sm:$0xff]
    %v108 = vld [vmem:[#allocation5 + $0x8] sm:$0xff]
    %v109 = vld [vmem:[#allocation5 + $0x10] sm:$0xff]
    %v110 = vld [vmem:[#allocation5 + $0x18] sm:$0xff]
    %v111 = vld [vmem:[#allocation7] sm:$0x3]
    %v113 = vperm.slane %v111, 0
    %v114 = vperm.slane %v111, 1
    %v121 = vunpack.c.l.b16 %v107
    %v122 = vunpack.c.h.b16 %v107
    %v123 = vunpack.c.l.b16 %v108
    %v124 = vunpack.c.h.b16 %v108
    %v125 = vunpack.c.l.b16 %v109
    %v126 = vunpack.c.h.b16 %v109
    %v127 = vunpack.c.l.b16 %v110
    %v128 = vunpack.c.h.b16 %v110
    %v129 = vpack.c.b16 %v123, %v121
    %v130 = vpack.c.b16 %v124, %v122
    %v131 = vpack.c.b16 %v127, %v125
    %v132 = vpack.c.b16 %v128, %v126
    %vm137 = vcmask 261120
    %v139 = vsel %vm137, %v106, 0
    %141 = vmatpush.bf16.msra.mxu0 0
    %142 = vmatpush.bf16.msra.mxu0 0
    %143 = vmatpush.bf16.msra.mxu0 0
    %144 = vmatpush.bf16.msra.mxu0 0
    %145 = vmatpush.bf16.msra.mxu0 0
    %146 = vmatpush.bf16.msra.mxu0 0
    %147 = vmatpush.bf16.msra.mxu0 %v131
    %148 = vmatpush.bf16.msra.mxu0 %v129
    %149 = vmatmul.bf16.gmra.mxu0 %v139
    %v150 = vpop.f32.mrf.mxu0
    %v151 = vadd.f32 %v113, %v150
    %v152 = vpop.f32.mrf.mxu0
    %v153 = vadd.f32 %v113, %v152
    %154 = vdwg.mxu0
    %155 = vmatpush.bf16.msra.mxu0 0
    %156 = vmatpush.bf16.msra.mxu0 0
    %157 = vmatpush.bf16.msra.mxu0 0
    %158 = vmatpush.bf16.msra.mxu0 0
    %159 = vmatpush.bf16.msra.mxu0 0
    %160 = vmatpush.bf16.msra.mxu0 0
    %161 = vmatpush.bf16.msra.mxu0 %v132
    %162 = vmatpush.bf16.msra.mxu0 %v130
    %163 = vmatmul.bf16.gmra.mxu0 %v139
    %v164 = vpop.f32.mrf.mxu0
    %v165 = vadd.f32 %v114, %v164
    %v166 = vpop.f32.mrf.mxu0
    %v167 = vadd.f32 %v114, %v166
    %168 = vdwg.mxu0
    %v169 = vmax.f32 %v151, 0.0
    %v170 = vmax.f32 %v165, 0.0
    %v171 = vmax.f32 %v153, 0.0
    %v172 = vmax.f32 %v167, 0.0
    %v173 = vpack.c.bf16 %v171, %v169
    %v174 = vpack.c.bf16 %v172, %v170
    %v175 = vld [vmem:[#allocation8] sm:$0xff]
    %v176 = vld [vmem:[#allocation8 + $0x8] sm:$0xff]
    %v177 = vld [vmem:[#allocation8 + $0x10] sm:$0xff]
    %v178 = vld [vmem:[#allocation8 + $0x18] sm:$0xff]
    %v179 = vld [vmem:[#allocation8 + $0x20] sm:$0xff]
    %v180 = vld [vmem:[#allocation8 + $0x28] sm:$0xff]
    %v181 = vld [vmem:[#allocation8 + $0x30] sm:$0xff]
    %v182 = vld [vmem:[#allocation8 + $0x38] sm:$0xff]
    %v183 = vld [vmem:[#allocation8 + $0x40] sm:$0xff]
    %v184 = vld [vmem:[#allocation8 + $0x48] sm:$0xff]
    %v185 = vld [vmem:[#allocation8 + $0x50] sm:$0xff]
    %v186 = vld [vmem:[#allocation8 + $0x58] sm:$0xff]
    %v187 = vld [vmem:[#allocation8 + $0x60] sm:$0xff]
    %v188 = vld [vmem:[#allocation8 + $0x68] sm:$0xff]
    %v189 = vld [vmem:[#allocation8 + $0x70] sm:$0xff]
    %v190 = vld [vmem:[#allocation8 + $0x78] sm:$0xff]
    %v191 = vld [vmem:[#allocation8 + $0x80] sm:$0xff]
    %v192 = vld [vmem:[#allocation8 + $0x88] sm:$0xff]
    %v193 = vld [vmem:[#allocation8 + $0x90] sm:$0xff]
    %v194 = vld [vmem:[#allocation8 + $0x98] sm:$0xff]
    %v195 = vld [vmem:[#allocation8 + $0xa0] sm:$0xff]
    %v196 = vld [vmem:[#allocation8 + $0xa8] sm:$0xff]
    %v197 = vld [vmem:[#allocation8 + $0xb0] sm:$0xff]
    %v198 = vld [vmem:[#allocation8 + $0xb8] sm:$0xff]
    %v199 = vld [vmem:[#allocation8 + $0xc0] sm:$0xff]
    %v200 = vld [vmem:[#allocation8 + $0xc8] sm:$0xff]
    %v201 = vld [vmem:[#allocation8 + $0xd0] sm:$0xff]
    %v202 = vld [vmem:[#allocation8 + $0xd8] sm:$0xff]
    %v203 = vld [vmem:[#allocation8 + $0xe0] sm:$0xff]
    %v204 = vld [vmem:[#allocation8 + $0xe8] sm:$0xff]
    %v205 = vld [vmem:[#allocation8 + $0xf0] sm:$0xff]
    %v206 = vld [vmem:[#allocation8 + $0xf8] sm:$0xff]
    %v207 = vld [vmem:[%s4] sm:$0x3]
    %v209 = vperm.slane %v207, 0
    %v210 = vperm.slane %v207, 1
    %v245 = vunpack.c.l.b16 %v175
    %v246 = vunpack.c.h.b16 %v175
    %v247 = vunpack.c.l.b16 %v176
    %v248 = vunpack.c.h.b16 %v176
    %v249 = vunpack.c.l.b16 %v177
    %v250 = vunpack.c.h.b16 %v177
    %v251 = vunpack.c.l.b16 %v178
    %v252 = vunpack.c.h.b16 %v178
    %v253 = vunpack.c.l.b16 %v179
    %v254 = vunpack.c.h.b16 %v179
    %v255 = vunpack.c.l.b16 %v180
    %v256 = vunpack.c.h.b16 %v180
    %v257 = vunpack.c.l.b16 %v181
    %v258 = vunpack.c.h.b16 %v181
    %v259 = vunpack.c.l.b16 %v182
    %v260 = vunpack.c.h.b16 %v182
    %v261 = vunpack.c.l.b16 %v183
    %v262 = vunpack.c.h.b16 %v183
    %v263 = vunpack.c.l.b16 %v184
    %v264 = vunpack.c.h.b16 %v184
    %v265 = vunpack.c.l.b16 %v185
    %v266 = vunpack.c.h.b16 %v185
    %v267 = vunpack.c.l.b16 %v186
    %v268 = vunpack.c.h.b16 %v186
    %v269 = vunpack.c.l.b16 %v187
    %v270 = vunpack.c.h.b16 %v187
    %v271 = vunpack.c.l.b16 %v188
    %v272 = vunpack.c.h.b16 %v188
    %v273 = vunpack.c.l.b16 %v189
    %v274 = vunpack.c.h.b16 %v189
    %v275 = vunpack.c.l.b16 %v190
    %v276 = vunpack.c.h.b16 %v190
    %v277 = vunpack.c.l.b16 %v191
    %v278 = vunpack.c.h.b16 %v191
    %v279 = vunpack.c.l.b16 %v192
    %v280 = vunpack.c.h.b16 %v192
    %v281 = vunpack.c.l.b16 %v193
    %v282 = vunpack.c.h.b16 %v193
    %v283 = vunpack.c.l.b16 %v194
    %v284 = vunpack.c.h.b16 %v194
    %v285 = vunpack.c.l.b16 %v195
    %v286 = vunpack.c.h.b16 %v195
    %v287 = vunpack.c.l.b16 %v196
    %v288 = vunpack.c.h.b16 %v196
    %v289 = vunpack.c.l.b16 %v197
    %v290 = vunpack.c.h.b16 %v197
    %v291 = vunpack.c.l.b16 %v198
    %v292 = vunpack.c.h.b16 %v198
    %v293 = vunpack.c.l.b16 %v199
    %v294 = vunpack.c.h.b16 %v199
    %v295 = vunpack.c.l.b16 %v200
    %v296 = vunpack.c.h.b16 %v200
    %v297 = vunpack.c.l.b16 %v201
    %v298 = vunpack.c.h.b16 %v201
    %v299 = vunpack.c.l.b16 %v202
    %v300 = vunpack.c.h.b16 %v202
    %v301 = vunpack.c.l.b16 %v203
    %v302 = vunpack.c.h.b16 %v203
    %v303 = vunpack.c.l.b16 %v204
    %v304 = vunpack.c.h.b16 %v204
    %v305 = vunpack.c.l.b16 %v205
    %v306 = vunpack.c.h.b16 %v205
    %v307 = vunpack.c.l.b16 %v206
    %v308 = vunpack.c.h.b16 %v206
    %v309 = vpack.c.b16 %v247, %v245
    %v310 = vpack.c.b16 %v248, %v246
    %v311 = vpack.c.b16 %v251, %v249
    %v312 = vpack.c.b16 %v252, %v250
    %v313 = vpack.c.b16 %v255, %v253
    %v314 = vpack.c.b16 %v256, %v254
    %v315 = vpack.c.b16 %v259, %v257
    %v316 = vpack.c.b16 %v260, %v258
    %v317 = vpack.c.b16 %v263, %v261
    %v318 = vpack.c.b16 %v264, %v262
    %v319 = vpack.c.b16 %v267, %v265
    %v320 = vpack.c.b16 %v268, %v266
    %v321 = vpack.c.b16 %v271, %v269
    %v322 = vpack.c.b16 %v272, %v270
    %v323 = vpack.c.b16 %v275, %v273
    %v324 = vpack.c.b16 %v276, %v274
    %v325 = vpack.c.b16 %v279, %v277
    %v326 = vpack.c.b16 %v280, %v278
    %v327 = vpack.c.b16 %v283, %v281
    %v328 = vpack.c.b16 %v284, %v282
    %v329 = vpack.c.b16 %v287, %v285
    %v330 = vpack.c.b16 %v288, %v286
    %v331 = vpack.c.b16 %v291, %v289
    %v332 = vpack.c.b16 %v292, %v290
    %v333 = vpack.c.b16 %v295, %v293
    %v334 = vpack.c.b16 %v296, %v294
    %v335 = vpack.c.b16 %v299, %v297
    %v336 = vpack.c.b16 %v300, %v298
    %v337 = vpack.c.b16 %v303, %v301
    %v338 = vpack.c.b16 %v304, %v302
    %v339 = vpack.c.b16 %v307, %v305
    %v340 = vpack.c.b16 %v308, %v306
    %373 = vmatpush.bf16.msra.mxu0 %v323
    %374 = vmatpush.bf16.msra.mxu0 %v321
    %375 = vmatpush.bf16.msra.mxu0 %v319
    %376 = vmatpush.bf16.msra.mxu0 %v317
    %377 = vmatpush.bf16.msra.mxu0 %v315
    %378 = vmatpush.bf16.msra.mxu0 %v313
    %379 = vmatpush.bf16.msra.mxu0 %v311
    %380 = vmatpush.bf16.msra.mxu0 %v309
    %381 = vmatmul.bf16.gmra.mxu0 %v173
    %v382 = vpop.f32.mrf.mxu0
    %v383 = vadd.f32 %v209, %v382
    %v384 = vpop.f32.mrf.mxu0
    %v385 = vadd.f32 %v209, %v384
    %386 = vdwg.mxu0
    %387 = vmatpush.bf16.msra.mxu0 %v339
    %388 = vmatpush.bf16.msra.mxu0 %v337
    %389 = vmatpush.bf16.msra.mxu0 %v335
    %390 = vmatpush.bf16.msra.mxu0 %v333
    %391 = vmatpush.bf16.msra.mxu0 %v331
    %392 = vmatpush.bf16.msra.mxu0 %v329
    %393 = vmatpush.bf16.msra.mxu0 %v327
    %394 = vmatpush.bf16.msra.mxu0 %v325
    %395 = vmatmul.bf16.gmra.mxu0 %v174
    %v396 = vpop.f32.mrf.mxu0
    %v397 = vadd.f32 %v383, %v396
    %v398 = vpop.f32.mrf.mxu0
    %v399 = vadd.f32 %v385, %v398
    %400 = vdwg.mxu0
    %401 = vmatpush.bf16.msra.mxu0 %v324
    %402 = vmatpush.bf16.msra.mxu0 %v322
    %403 = vmatpush.bf16.msra.mxu0 %v320
    %404 = vmatpush.bf16.msra.mxu0 %v318
    %405 = vmatpush.bf16.msra.mxu0 %v316
    %406 = vmatpush.bf16.msra.mxu0 %v314
    %407 = vmatpush.bf16.msra.mxu0 %v312
    %408 = vmatpush.bf16.msra.mxu0 %v310
    %409 = vmatmul.bf16.gmra.mxu0 %v173
    %v410 = vpop.f32.mrf.mxu0
    %v411 = vadd.f32 %v210, %v410
    %v412 = vpop.f32.mrf.mxu0
    %v413 = vadd.f32 %v210, %v412
    %414 = vdwg.mxu0
    %415 = vmatpush.bf16.msra.mxu0 %v340
    %416 = vmatpush.bf16.msra.mxu0 %v338
    %417 = vmatpush.bf16.msra.mxu0 %v336
    %418 = vmatpush.bf16.msra.mxu0 %v334
    %419 = vmatpush.bf16.msra.mxu0 %v332
    %420 = vmatpush.bf16.msra.mxu0 %v330
    %421 = vmatpush.bf16.msra.mxu0 %v328
    %422 = vmatpush.bf16.msra.mxu0 %v326
    %423 = vmatmul.bf16.gmra.mxu0 %v174
    %v424 = vpop.f32.mrf.mxu0
    %v425 = vadd.f32 %v411, %v424
    %v426 = vpop.f32.mrf.mxu0
    %v427 = vadd.f32 %v413, %v426
    %428 = vdwg.mxu0
    %v429 = vmax.f32 %v397, 0.0
    %v430 = vmax.f32 %v425, 0.0
    %v431 = vmax.f32 %v399, 0.0
    %v432 = vmax.f32 %v427, 0.0
    %v433 = vpack.c.bf16 %v431, %v429
    %v434 = vpack.c.bf16 %v432, %v430
    %v435 = vld [vmem:[#allocation10] sm:$0xf]
    %v436 = vld [vmem:[#allocation10 + $0x4] sm:$0xf]
    %v437 = vld [vmem:[#allocation10 + $0x8] sm:$0xf]
    %v438 = vld [vmem:[#allocation10 + $0xc] sm:$0xf]
    %v439 = vld [vmem:[#allocation10 + $0x10] sm:$0xf]
    %v440 = vld [vmem:[#allocation10 + $0x14] sm:$0xf]
    %v441 = vld [vmem:[#allocation10 + $0x18] sm:$0xf]
    %v442 = vld [vmem:[#allocation10 + $0x1c] sm:$0xf]
    %v443 = vld [vmem:[#allocation10 + $0x20] sm:$0xf]
    %v444 = vld [vmem:[#allocation10 + $0x24] sm:$0xf]
    %v445 = vld [vmem:[#allocation10 + $0x28] sm:$0xf]
    %v446 = vld [vmem:[#allocation10 + $0x2c] sm:$0xf]
    %v447 = vld [vmem:[#allocation10 + $0x30] sm:$0xf]
    %v448 = vld [vmem:[#allocation10 + $0x34] sm:$0xf]
    %v449 = vld [vmem:[#allocation10 + $0x38] sm:$0xf]
    %v450 = vld [vmem:[#allocation10 + $0x3c] sm:$0xf]
    %v451 = vld [vmem:[#allocation10 + $0x40] sm:$0xf]
    %v452 = vld [vmem:[#allocation10 + $0x44] sm:$0xf]
    %v453 = vld [vmem:[#allocation10 + $0x48] sm:$0xf]
    %v454 = vld [vmem:[#allocation10 + $0x4c] sm:$0xf]
    %v455 = vld [vmem:[#allocation10 + $0x50] sm:$0xf]
    %v456 = vld [vmem:[#allocation10 + $0x54] sm:$0xf]
    %v457 = vld [vmem:[#allocation10 + $0x58] sm:$0xf]
    %v458 = vld [vmem:[#allocation10 + $0x5c] sm:$0xf]
    %v459 = vld [vmem:[#allocation10 + $0x60] sm:$0xf]
    %v460 = vld [vmem:[#allocation10 + $0x64] sm:$0xf]
    %v461 = vld [vmem:[#allocation10 + $0x68] sm:$0xf]
    %v462 = vld [vmem:[#allocation10 + $0x6c] sm:$0xf]
    %v463 = vld [vmem:[#allocation10 + $0x70] sm:$0xf]
    %v464 = vld [vmem:[#allocation10 + $0x74] sm:$0xf]
    %v465 = vld [vmem:[#allocation10 + $0x78] sm:$0xf]
    %v466 = vld [vmem:[#allocation10 + $0x7c] sm:$0xf]
    %v467 = vld [vmem:[%s6] sm:$0x1]
    %v469 = vperm.slane %v467, 0
    %v503 = vunpack.c.l.b16 %v435
    %v504 = vunpack.c.l.b16 %v436
    %v505 = vunpack.c.l.b16 %v437
    %v506 = vunpack.c.l.b16 %v438
    %v507 = vunpack.c.l.b16 %v439
    %v508 = vunpack.c.l.b16 %v440
    %v509 = vunpack.c.l.b16 %v441
    %v510 = vunpack.c.l.b16 %v442
    %v511 = vunpack.c.l.b16 %v443
    %v512 = vunpack.c.l.b16 %v444
    %v513 = vunpack.c.l.b16 %v445
    %v514 = vunpack.c.l.b16 %v446
    %v515 = vunpack.c.l.b16 %v447
    %v516 = vunpack.c.l.b16 %v448
    %v517 = vunpack.c.l.b16 %v449
    %v518 = vunpack.c.l.b16 %v450
    %v519 = vunpack.c.l.b16 %v451
    %v520 = vunpack.c.l.b16 %v452
    %v521 = vunpack.c.l.b16 %v453
    %v522 = vunpack.c.l.b16 %v454
    %v523 = vunpack.c.l.b16 %v455
    %v524 = vunpack.c.l.b16 %v456
    %v525 = vunpack.c.l.b16 %v457
    %v526 = vunpack.c.l.b16 %v458
    %v527 = vunpack.c.l.b16 %v459
    %v528 = vunpack.c.l.b16 %v460
    %v529 = vunpack.c.l.b16 %v461
    %v530 = vunpack.c.l.b16 %v462
    %v531 = vunpack.c.l.b16 %v463
    %v532 = vunpack.c.l.b16 %v464
    %v533 = vunpack.c.l.b16 %v465
    %v534 = vunpack.c.l.b16 %v466
    %v535 = vpack.c.b16 %v504, %v503
    %v536 = vpack.c.b16 %v506, %v505
    %v537 = vpack.c.b16 %v508, %v507
    %v538 = vpack.c.b16 %v510, %v509
    %v539 = vpack.c.b16 %v512, %v511
    %v540 = vpack.c.b16 %v514, %v513
    %v541 = vpack.c.b16 %v516, %v515
    %v542 = vpack.c.b16 %v518, %v517
    %v543 = vpack.c.b16 %v520, %v519
    %v544 = vpack.c.b16 %v522, %v521
    %v545 = vpack.c.b16 %v524, %v523
    %v546 = vpack.c.b16 %v526, %v525
    %v547 = vpack.c.b16 %v528, %v527
    %v548 = vpack.c.b16 %v530, %v529
    %v549 = vpack.c.b16 %v532, %v531
    %v550 = vpack.c.b16 %v534, %v533
    %567 = vmatpush.bf16.msra.mxu0 %v542
    %568 = vmatpush.bf16.msra.mxu0 %v541
    %569 = vmatpush.bf16.msra.mxu0 %v540
    %570 = vmatpush.bf16.msra.mxu0 %v539
    %571 = vmatpush.bf16.msra.mxu0 %v538
    %572 = vmatpush.bf16.msra.mxu0 %v537
    %573 = vmatpush.bf16.msra.mxu0 %v536
    %574 = vmatpush.bf16.msra.mxu0 %v535
    %575 = vmatmul.bf16.gmra.mxu0 %v433
    %v576 = vpop.f32.mrf.mxu0
    %v577 = vadd.f32 %v469, %v576
    %v578 = vpop.f32.mrf.mxu0
    %v579 = vadd.f32 %v469, %v578
    %580 = vdwg.mxu0
    %581 = vmatpush.bf16.msra.mxu0 %v550
    %582 = vmatpush.bf16.msra.mxu0 %v549
    %583 = vmatpush.bf16.msra.mxu0 %v548
    %584 = vmatpush.bf16.msra.mxu0 %v547
    %585 = vmatpush.bf16.msra.mxu0 %v546
    %586 = vmatpush.bf16.msra.mxu0 %v545
    %587 = vmatpush.bf16.msra.mxu0 %v544
    %588 = vmatpush.bf16.msra.mxu0 %v543
    %589 = vmatmul.bf16.gmra.mxu0 %v434
    %v590 = vpop.f32.mrf.mxu0
    %v591 = vadd.f32 %v577, %v590
    %v592 = vpop.f32.mrf.mxu0
    %v593 = vadd.f32 %v579, %v592
    %594 = vdwg.mxu0
    %v595 = vpack.c.bf16 %v591, %v591
    %v596 = vpack.c.bf16 %v593, %v593
    %597 = vst [vmem:[#allocation11] sm:$0xf] %v595
    %598 = vst [vmem:[#allocation11 + $0x4] sm:$0xf] %v596
    // Predicated region
    $region50: #{tpu_custom_call.1} parent=1 // pred_check
      _
    $region51: #{tpu_custom_call.1} parent=1 // pred_check_branch
      %600 = sbr.rel (0) target = $region53
    $region52: #{tpu_custom_call.1} parent=1 // pred_region
      %602 = vsyncadd [#allocation4], 64
      %s603 = sshll.u32 [#allocation11], 4
      %s604 = int_to_ptr.vmem [resolvable:$true] %s603
      %s605 = sshll.u32 %s7, 4
      %s606 = int_to_ptr.hbm [resolvable:$true] %s605
      %611 = dma.vmem_to_hbm [thread:$0]  %s604, 64, %s606, [#allocation4], 64, 64, 4
    $region53: #{tpu_custom_call.1} parent=1 // pred_fallthru
      _
    // Predicated region
    $region54: #{tpu_custom_call.1} parent=1 // pred_check
      _
    $region55: #{tpu_custom_call.1} parent=1 // pred_check_branch
      %613 = sbr.rel (0) target = $region57
    $region56: #{tpu_custom_call.1} parent=1 // pred_region
      %615 = dma.done [#allocation4], 128
    $region57: #{tpu_custom_call.1} parent=1 // pred_fallthru
      _
    %616 = vsyncpa [#allocation3], 1
    %617 = vsyncpa [#allocation6], 1
    %618 = vsyncpa [#allocation9], 1
    %619 = vsyncpa [#allocation4], 1

</llo_original>
